<compile_context>
chip_gen: v6e
topology: v6e:2x2x1
jax: 0.10.0
libtpu: 0.0.40
codegen_flags: <defaults>
</compile_context>

<pallas_src>
import functools

import jax
import jax.numpy as jnp
from jax.experimental import pallas as pl
from jax.experimental.pallas import tpu as pltpu

LANE = 128     # TPU lane width (last-dim tile)
SUBLANE = 8    # TPU sublane width (second-to-last-dim tile)


def _round_up(x, m):
    return ((x + m - 1) // m) * m


def _slab_offsets(state_dim, action_dim):
    """Row offsets of each parameter segment inside the packed (rows, 128) slab.

    Every band starts at a sublane-aligned (multiple-of-8) row so the static
    kernel slices never straddle an (8,128) tile boundary.
    """
    off_w1s = 0                                   # W1 state half:  [0, sd)
    off_w1a = _round_up(state_dim, SUBLANE)       # W1 action half: [off, off+ad)
    off_b1 = off_w1a + _round_up(action_dim, SUBLANE)   # 1 row (8-row band)
    off_w2 = off_b1 + SUBLANE                     # 128 rows: W2 padded to (128,128)
    off_b2 = off_w2 + LANE                        # 1 row
    off_w3 = off_b2 + SUBLANE                     # 128 rows: W3 padded to (128,128)
    off_b3 = off_w3 + LANE                        # 1 row (scalar bias in lane 0)
    rows = off_b3 + SUBLANE
    return off_w1s, off_w1a, off_b1, off_w2, off_b2, off_w3, off_b3, rows


def pack_critic_params(w1, b1, w2, b2, w3, b3, state_dim, action_dim):
    """Pack all linear-layer params into one zero-padded (rows, 128) f32 slab.

    Done once at init; critic_forward receives only this slab.
    """
    d_in, fc1 = w1.shape
    fc1_b, fc2 = w2.shape
    assert d_in == state_dim + action_dim
    assert fc1_b == fc1 and w3.shape == (fc2, 1)
    assert fc1 <= LANE and fc2 <= LANE, "hidden dims must be <= 128 for this packing"

    off_w1s, off_w1a, off_b1, off_w2, off_b2, off_w3, off_b3, rows = _slab_offsets(
        state_dim, action_dim)

    slab = jnp.zeros((rows, LANE), jnp.float32)
    slab = slab.at[off_w1s:off_w1s + state_dim, :fc1].set(
        w1[:state_dim].astype(jnp.float32))
    slab = slab.at[off_w1a:off_w1a + action_dim, :fc1].set(
        w1[state_dim:].astype(jnp.float32))
    slab = slab.at[off_b1, :fc1].set(b1.astype(jnp.float32))
    slab = slab.at[off_w2:off_w2 + fc1, :fc2].set(w2.astype(jnp.float32))
    slab = slab.at[off_b2, :fc2].set(b2.astype(jnp.float32))
    slab = slab.at[off_w3:off_w3 + fc2, :1].set(w3.astype(jnp.float32))
    slab = slab.at[off_b3, 0].set(b3.reshape(-1)[0].astype(jnp.float32))
    return slab


def _critic_kernel(state_ref, action_ref, p_ref, out_ref, *, state_dim, action_dim):
    (off_w1s, off_w1a, off_b1, off_w2, off_b2, off_w3, off_b3,
     _) = _slab_offsets(state_dim, action_dim)

    # fc1 on cat([state, action], 1), split into two matmuls (both halves of W1
    # live at sublane-aligned offsets in the slab).  Padded lanes of W1/b1 are
    # zero, so the extra (128 - fc1) columns of h1 stay exactly zero after ReLU.
    h1 = (jnp.dot(state_ref[...], p_ref[off_w1s:off_w1s + state_dim, :],
                  preferred_element_type=jnp.float32)
          + jnp.dot(action_ref[...], p_ref[off_w1a:off_w1a + action_dim, :],
                    preferred_element_type=jnp.float32)
          + p_ref[off_b1:off_b1 + 1, :])
    h1 = jnp.maximum(h1, 0.0)

    # fc2 + relu (W2 zero-padded to (128, 128) -> single clean MXU pass).
    h2 = (jnp.dot(h1, p_ref[off_w2:off_w2 + LANE, :],
                  preferred_element_type=jnp.float32)
          + p_ref[off_b2:off_b2 + 1, :])
    h2 = jnp.maximum(h2, 0.0)

    # fc3: W3 has nonzeros only in column 0, so the scalar output lands in
    # lane 0 of a lane-dense (TB, 128) tile; other lanes are exactly zero.
    y = (jnp.dot(h2, p_ref[off_w3:off_w3 + LANE, :],
                 preferred_element_type=jnp.float32)
         + p_ref[off_b3:off_b3 + 1, :])
    out_ref[...] = y.astype(out_ref.dtype)


def critic_forward(state, action, packed_params):
    """state: (1, B, state_dim) or (B, state_dim); action: (B, action_dim).

    packed_params: slab from pack_critic_params (built once at init).
    Returns y of shape (B, 1).
    """
    if state.ndim == 3:
        state = jnp.squeeze(state, axis=0)   # matches torch's state.squeeze(0)
    B, sd = state.shape
    ad = action.shape[1]
    d_in = sd + ad

    # Row tile: whole (8-padded) batch for small B; 512-row blocks for large B
    # (keeps >=2 grid steps for megacore sharding while amortizing per-step
    # overhead; all buffers fit easily within VMEM with double buffering).
    TB = 512 if B > 512 else _round_up(B, SUBLANE)
    padded_B = _round_up(B, TB)
    num_blocks = padded_B // TB

    state = state.astype(jnp.float32)
    action = action.astype(jnp.float32)
    if padded_B != B:
        state = jnp.pad(state, ((0, padded_B - B), (0, 0)))
        action = jnp.pad(action, ((0, padded_B - B), (0, 0)))

    rows = packed_params.shape[0]
    kernel = functools.partial(_critic_kernel, state_dim=sd, action_dim=ad)

    # Advisory cost estimate (kernel is tiny / overhead bound at small B).
    flops = 2 * padded_B * (d_in * LANE + 2 * LANE * LANE)
    bytes_accessed = 4 * (padded_B * (d_in + LANE) + rows * LANE)

    out = pl.pallas_call(
        kernel,
        out_shape=jax.ShapeDtypeStruct((padded_B, LANE), jnp.float32),
        grid_spec=pltpu.PrefetchScalarGridSpec(
            num_scalar_prefetch=0,
            grid=(num_blocks,),
            in_specs=[
                pl.BlockSpec((TB, sd), lambda i: (i, 0)),      # state rows
                pl.BlockSpec((TB, ad), lambda i: (i, 0)),      # action rows
                pl.BlockSpec((rows, LANE), lambda i: (0, 0)),  # params: VMEM-resident
            ],
            out_specs=pl.BlockSpec((TB, LANE), lambda i: (i, 0)),
        ),
        compiler_params=pltpu.CompilerParams(
            dimension_semantics=("parallel",)),
        cost_estimate=pl.CostEstimate(
            flops=flops, transcendentals=0, bytes_accessed=bytes_accessed),
    )(state, action, packed_params)

    # Lane-dense kernel output; the scalar critic value lives in column 0.
    return out[:B, :1]


def init_params(key, state_dim, action_dim, fc1_dims=16, fc2_dims=16):
    """Deterministic init mimicking nn.Linear's uniform(-1/sqrt(fan_in), ...)."""
    ks = jax.random.split(key, 6)
    d_in = state_dim + action_dim

    def lin(kw, kb, fan_in, fan_out):
        bound = 1.0 / jnp.sqrt(fan_in)
        w = jax.random.uniform(kw, (fan_in, fan_out), jnp.float32, -bound, bound)
        b = jax.random.uniform(kb, (fan_out,), jnp.float32, -bound, bound)
        return w, b

    w1, b1 = lin(ks[0], ks[1], d_in, fc1_dims)
    w2, b2 = lin(ks[2], ks[3], fc1_dims, fc2_dims)
    w3, b3 = lin(ks[4], ks[5], fc2_dims, 1)
    return {"w1": w1, "b1": b1, "w2": w2, "b2": b2, "w3": w3, "b3": b3}


if __name__ == "__main__":
    key = jax.random.PRNGKey(0)
    k_p, k_s, k_a = jax.random.split(key, 3)

    state_dim, action_dim = 8, 4
    batch = 2

    raw = init_params(k_p, state_dim, action_dim, fc1_dims=16, fc2_dims=16)
    packed = pack_critic_params(raw["w1"], raw["b1"], raw["w2"], raw["b2"],
                                raw["w3"], raw["b3"],
                                state_dim, action_dim)   # done once at init

    state = jax.random.normal(k_s, (1, batch, state_dim), jnp.float32)  # squeezed in fwd
    action = jax.random.normal(k_a, (batch, action_dim), jnp.float32)

    y = jax.jit(critic_forward)(state, action, packed)
    y = jax.block_until_ready(y)

    # Pure-JAX reference check (same math, no Pallas).
    s2 = jnp.squeeze(state, 0)
    x = jnp.concatenate([s2, action], axis=1)
    h = jnp.maximum(x @ raw["w1"] + raw["b1"], 0.0)
    h = jnp.maximum(h @ raw["w2"] + raw["b2"], 0.0)
    y_ref = h @ raw["w3"] + raw["b3"]

    assert y.shape == (batch, 1)
    assert jnp.allclose(y, y_ref, atol=1e-5, rtol=1e-5)

    print("KERNEL_OK")
</pallas_src>

<mosaic_0001>
module attributes {stable_mosaic.version = 11 : i64} {
  func.func @_critic_kernel(%arg0: i32, %arg1: memref<8x8xf32, #tpu.memory_space<vmem>>, %arg2: memref<8x4xf32, #tpu.memory_space<vmem>>, %arg3: memref<296x128xf32, #tpu.memory_space<vmem>>, %arg4: memref<8x128xf32, #tpu.memory_space<vmem>>) attributes {dimension_semantics = [#tpu.dimension_semantics<parallel>], iteration_bounds = array<i64: 1>, scalar_prefetch = 0 : i64, scratch_operands = 0 : i64, tpu.core_type = #tpu.core_type<tc>, window_params = [{transform_indices = @transform_0, window_bounds = array<i64: 8, 8>}, {transform_indices = @transform_1, window_bounds = array<i64: 8, 4>}, {pipeline_mode = #tpu.pipeline_mode<synchronous>, transform_indices = @transform_2, window_bounds = array<i64: 296, 128>}, {transform_indices = @transform_3, window_bounds = array<i64: 8, 128>}]} {
    %c0 = arith.constant 0 : index
    %c0_0 = arith.constant 0 : index
    %0 = vector.load %arg1[%c0, %c0_0] : memref<8x8xf32, #tpu.memory_space<vmem>>, vector<8x8xf32>
    %c0_1 = arith.constant 0 : index
    %c0_2 = arith.constant 0 : index
    %1 = vector.load %arg3[%c0_1, %c0_2] : memref<296x128xf32, #tpu.memory_space<vmem>>, vector<8x128xf32>
    %cst = arith.constant dense<0.000000e+00> : vector<8x128xf32>
    %2 = tpu.matmul %0, %1, %cst {dimension_numbers = #tpu.dot_dimension_numbers<[1], [0], [0], [1], [0, 0, 1, 1], [], []>} : vector<8x8xf32>, vector<8x128xf32>, vector<8x128xf32> -> vector<8x128xf32>
    %c0_3 = arith.constant 0 : index
    %c0_4 = arith.constant 0 : index
    %3 = vector.load %arg2[%c0_3, %c0_4] : memref<8x4xf32, #tpu.memory_space<vmem>>, vector<8x4xf32>
    %c8 = arith.constant 8 : index
    %c0_5 = arith.constant 0 : index
    %4 = vector.load %arg3[%c8, %c0_5] : memref<296x128xf32, #tpu.memory_space<vmem>>, vector<4x128xf32>
    %cst_6 = arith.constant dense<0.000000e+00> : vector<8x128xf32>
    %5 = tpu.matmul %3, %4, %cst_6 {dimension_numbers = #tpu.dot_dimension_numbers<[1], [0], [0], [1], [0, 0, 1, 1], [], []>} : vector<8x4xf32>, vector<4x128xf32>, vector<8x128xf32> -> vector<8x128xf32>
    %6 = arith.addf %2, %5 : vector<8x128xf32>
    %c16 = arith.constant 16 : index
    %c0_7 = arith.constant 0 : index
    %7 = vector.load %arg3[%c16, %c0_7] : memref<296x128xf32, #tpu.memory_space<vmem>>, vector<1x128xf32>
    %8 = vector.broadcast %7 : vector<1x128xf32> to vector<8x128xf32>
    %9 = arith.addf %6, %8 : vector<8x128xf32>
    %cst_8 = arith.constant 0.000000e+00 : f32
    %10 = vector.broadcast %cst_8 : f32 to vector<8x128xf32>
    %11 = arith.maximumf %9, %10 : vector<8x128xf32>
    %c24 = arith.constant 24 : index
    %c0_9 = arith.constant 0 : index
    %12 = vector.load %arg3[%c24, %c0_9] : memref<296x128xf32, #tpu.memory_space<vmem>>, vector<128x128xf32>
    %cst_10 = arith.constant dense<0.000000e+00> : vector<8x128xf32>
    %13 = tpu.matmul %11, %12, %cst_10 {dimension_numbers = #tpu.dot_dimension_numbers<[1], [0], [0], [1], [0, 0, 1, 1], [], []>} : vector<8x128xf32>, vector<128x128xf32>, vector<8x128xf32> -> vector<8x128xf32>
    %c152 = arith.constant 152 : index
    %c0_11 = arith.constant 0 : index
    %14 = vector.load %arg3[%c152, %c0_11] : memref<296x128xf32, #tpu.memory_space<vmem>>, vector<1x128xf32>
    %15 = vector.broadcast %14 : vector<1x128xf32> to vector<8x128xf32>
    %16 = arith.addf %13, %15 : vector<8x128xf32>
    %cst_12 = arith.constant 0.000000e+00 : f32
    %17 = vector.broadcast %cst_12 : f32 to vector<8x128xf32>
    %18 = arith.maximumf %16, %17 : vector<8x128xf32>
    %c160 = arith.constant 160 : index
    %c0_13 = arith.constant 0 : index
    %19 = vector.load %arg3[%c160, %c0_13] : memref<296x128xf32, #tpu.memory_space<vmem>>, vector<128x128xf32>
    %cst_14 = arith.constant dense<0.000000e+00> : vector<8x128xf32>
    %20 = tpu.matmul %18, %19, %cst_14 {dimension_numbers = #tpu.dot_dimension_numbers<[1], [0], [0], [1], [0, 0, 1, 1], [], []>} : vector<8x128xf32>, vector<128x128xf32>, vector<8x128xf32> -> vector<8x128xf32>
    %c288 = arith.constant 288 : index
    %c0_15 = arith.constant 0 : index
    %21 = vector.load %arg3[%c288, %c0_15] : memref<296x128xf32, #tpu.memory_space<vmem>>, vector<1x128xf32>
    %22 = vector.broadcast %21 : vector<1x128xf32> to vector<8x128xf32>
    %23 = arith.addf %20, %22 : vector<8x128xf32>
    %c0_16 = arith.constant 0 : index
    %c0_17 = arith.constant 0 : index
    %24 = vector.load %arg4[%c0_16, %c0_17] : memref<8x128xf32, #tpu.memory_space<vmem>>, vector<8x128xf32>
    tpu.vector_store %arg4[%c0_16, %c0_17], %23 {strides = array<i32>} : memref<8x128xf32, #tpu.memory_space<vmem>>, vector<8x128xf32>,
    return
  }
  func.func @transform_0(%arg0: i32) -> (i32, i32) {
    %c0_i32 = arith.constant 0 : i32
    %c0_i32_0 = arith.constant 0 : i32
    return %arg0, %c0_i32 : i32, i32
  }
  func.func @transform_1(%arg0: i32) -> (i32, i32) {
    %c0_i32 = arith.constant 0 : i32
    %c0_i32_0 = arith.constant 0 : i32
    return %arg0, %c0_i32 : i32, i32
  }
  func.func @transform_2(%arg0: i32) -> (i32, i32) {
    %c0_i32 = arith.constant 0 : i32
    %c0_i32_0 = arith.constant 0 : i32
    %c0_i32_1 = arith.constant 0 : i32
    return %c0_i32, %c0_i32_0 : i32, i32
  }
  func.func @transform_3(%arg0: i32) -> (i32, i32) {
    %c0_i32 = arith.constant 0 : i32
    %c0_i32_0 = arith.constant 0 : i32
    return %arg0, %c0_i32 : i32, i32
  }
}

</mosaic_0001>

<llo_original>
// kernel: critic_forward.1
$region0: #{critic_forward.1}
  #allocation0 [shape = 'u32[]', space=smem, size = 0x4, offset = 0x4, fixed_abs, tag = 'smem constant byte address 0x4 - core index']
  #allocation1 [shape = 'u32[144,128]{1,0:T(1,128)}', space=vmem, size = 0x12000, scoped, tag = 'internal scratch']
  %s0 = inlined_call_operand.vmem [shape: f32[8,8], index: 0, kind: input, shape index: {}]
  %s1 = inlined_call_operand.vmem [shape: f32[8,4], index: 1, kind: input, shape index: {}]
  %s2 = inlined_call_operand.hbm [shape: f32[296,128], index: 2, kind: input, shape index: {}]
  %s3 = inlined_call_operand.vmem [shape: f32[8,128], index: 3, kind: output, shape index: {}]
  %s4 = sld [smem:[#allocation0]]
  $region26: #{critic_forward.1} parent=0
    _
  %s6 = ssub.s32 1, %s4
  %s7 = scalar_select 0, %s6, %s4
  $region1: #{critic_forward.1} parent=0
    #allocation2 [shape = 'u8[151552]{0}', space=vmem, size = 0x25000, scoped, tag = 'input window, operand 2, single buffered']
    #allocation3 [shape = 's32[1]{0}', space=sflag, size = 0x4, scoped, tag = 'scoped memory for critic_forward.1']
    %8 = vsyncpa [#allocation3], 0
    // Predicated region
    $region2: #{critic_forward.1} parent=1 // pred_check
      _
    $region3: #{critic_forward.1} parent=1 // pred_check_branch
      %10 = sbr.rel (0) target = $region5
    $region4: #{critic_forward.1} parent=1 // pred_region
      _
    $region5: #{critic_forward.1} parent=1 // pred_fallthru
      _
    // Predicated region
    $region6: #{critic_forward.1} parent=1 // pred_check
      _
    $region7: #{critic_forward.1} parent=1 // pred_check_branch
      %12 = sbr.rel (0) target = $region9
    $region8: #{critic_forward.1} parent=1 // pred_region
      _
    $region9: #{critic_forward.1} parent=1 // pred_fallthru
      _
    // Predicated region
    $region10: #{critic_forward.1} parent=1 // pred_check
      _
    $region11: #{critic_forward.1} parent=1 // pred_check_branch
      %14 = sbr.rel (0) target = $region13
    $region12: #{critic_forward.1} parent=1 // pred_region
      %s16 = ssub.s32 4736, 4736
      %17 = vsyncadd [#allocation3], %s16
      %s18 = sshll.u32 [#allocation2], 4
      %s19 = int_to_ptr.vmem [resolvable:$true] %s18
      %24 = dma.hbm_to_vmem [thread:$0]  %s2, 4736, %s19, [#allocation3], 128, 128, 8
    $region13: #{critic_forward.1} parent=1 // pred_fallthru
      _
    // Predicated region
    $region14: #{critic_forward.1} parent=1 // pred_check
      _
    $region15: #{critic_forward.1} parent=1 // pred_check_branch
      %26 = sbr.rel (0) target = $region17
    $region16: #{critic_forward.1} parent=1 // pred_region
      %27 = dma.done [#allocation3], 4736
    $region17: #{critic_forward.1} parent=1 // pred_fallthru
      _
    %v28 = vld [vmem:[%s0] sm:$0xff]
    %v29 = vld [vmem:[#allocation2] sm:$0xff]
    %v30 = vld [vmem:[%s1] sm:$0xff]
    %v31 = vld [vmem:[#allocation2 + $0x8] sm:$0xf]
    %vm32 = vcmask 31744
    %v34 = vsel %vm32, %v30, 0
    %vm36 = vcmask 1043456
    %v38 = vsel %vm36, %v31, 0
    %40 = vmatprep.subr.mxu0 0.0
    %41 = vmatpush1.msra.mxu0 0.0
    %42 = vmatprep.subr.mxu0 0.0
    %43 = vmatpush1.msra.mxu0 0.0
    %44 = vmatprep.subr.mxu0 0.0
    %45 = vmatpush1.msra.mxu0 0.0
    %46 = vmatprep.subr.mxu0 0.0
    %47 = vmatpush1.msra.mxu0 0.0
    %48 = vmatprep.subr.mxu0 0.0
    %49 = vmatpush1.msra.mxu0 0.0
    %50 = vmatprep.subr.mxu0 0.0
    %51 = vmatpush1.msra.mxu0 0.0
    %52 = vmatprep.subr.mxu0 0.0
    %53 = vmatpush1.msra.mxu0 0.0
    %54 = vmatprep.subr.mxu0 0.0
    %55 = vmatpush1.msra.mxu0 0.0
    %56 = vmatprep.subr.mxu0 0.0
    %57 = vmatpush1.msra.mxu0 0.0
    %58 = vmatprep.subr.mxu0 0.0
    %59 = vmatpush1.msra.mxu0 0.0
    %60 = vmatprep.subr.mxu0 0.0
    %61 = vmatpush1.msra.mxu0 0.0
    %62 = vmatprep.subr.mxu0 0.0
    %63 = vmatpush1.msra.mxu0 0.0
    %64 = vmatprep.subr.mxu0 0.0
    %65 = vmatpush1.msra.mxu0 0.0
    %66 = vmatprep.subr.mxu0 0.0
    %67 = vmatpush1.msra.mxu0 0.0
    %68 = vmatprep.subr.mxu0 0.0
    %69 = vmatpush1.msra.mxu0 0.0
    %70 = vmatprep.subr.mxu0 0.0
    %71 = vmatpush1.msra.mxu0 %v38
    %72 = vmatprep.subr.mxu0 0.0
    %73 = vmatpush2.msra.mxu0 0.0
    %74 = vmatprep.subr.mxu0 0.0
    %75 = vmatpush2.msra.mxu0 0.0
    %76 = vmatprep.subr.mxu0 0.0
    %77 = vmatpush2.msra.mxu0 0.0
    %78 = vmatprep.subr.mxu0 0.0
    %79 = vmatpush2.msra.mxu0 0.0
    %80 = vmatprep.subr.mxu0 0.0
    %81 = vmatpush2.msra.mxu0 0.0
    %82 = vmatprep.subr.mxu0 0.0
    %83 = vmatpush2.msra.mxu0 0.0
    %84 = vmatprep.subr.mxu0 0.0
    %85 = vmatpush2.msra.mxu0 0.0
    %86 = vmatprep.subr.mxu0 0.0
    %87 = vmatpush2.msra.mxu0 0.0
    %88 = vmatprep.subr.mxu0 0.0
    %89 = vmatpush2.msra.mxu0 0.0
    %90 = vmatprep.subr.mxu0 0.0
    %91 = vmatpush2.msra.mxu0 0.0
    %92 = vmatprep.subr.mxu0 0.0
    %93 = vmatpush2.msra.mxu0 0.0
    %94 = vmatprep.subr.mxu0 0.0
    %95 = vmatpush2.msra.mxu0 0.0
    %96 = vmatprep.subr.mxu0 0.0
    %97 = vmatpush2.msra.mxu0 0.0
    %98 = vmatprep.subr.mxu0 0.0
    %99 = vmatpush2.msra.mxu0 0.0
    %100 = vmatprep.subr.mxu0 0.0
    %101 = vmatpush2.msra.mxu0 0.0
    %102 = vmatprep.subr.mxu0 0.0
    %103 = vmatpush2.msra.mxu0 0.0
    %104 = vmatprep.mubr.f32.mxu0 0.0
    %105 = vmatmul.mubr.f32.gmra.mxu0 %v34
    %v106 = vpop.f32.mrf.mxu0
    %v107 = vadd.f32 0.0, %v106
    %v108 = vpop.f32.mrf.mxu0
    %109 = vdwg.mxu0
    %vm110 = vcmask 64512
    %v112 = vsel %vm110, %v28, 0
    %114 = vmatprep.subr.mxu0 0.0
    %115 = vmatpush1.msra.mxu0 0.0
    %116 = vmatprep.subr.mxu0 0.0
    %117 = vmatpush1.msra.mxu0 0.0
    %118 = vmatprep.subr.mxu0 0.0
    %119 = vmatpush1.msra.mxu0 0.0
    %120 = vmatprep.subr.mxu0 0.0
    %121 = vmatpush1.msra.mxu0 0.0
    %122 = vmatprep.subr.mxu0 0.0
    %123 = vmatpush1.msra.mxu0 0.0
    %124 = vmatprep.subr.mxu0 0.0
    %125 = vmatpush1.msra.mxu0 0.0
    %126 = vmatprep.subr.mxu0 0.0
    %127 = vmatpush1.msra.mxu0 0.0
    %128 = vmatprep.subr.mxu0 0.0
    %129 = vmatpush1.msra.mxu0 0.0
    %130 = vmatprep.subr.mxu0 0.0
    %131 = vmatpush1.msra.mxu0 0.0
    %132 = vmatprep.subr.mxu0 0.0
    %133 = vmatpush1.msra.mxu0 0.0
    %134 = vmatprep.subr.mxu0 0.0
    %135 = vmatpush1.msra.mxu0 0.0
    %136 = vmatprep.subr.mxu0 0.0
    %137 = vmatpush1.msra.mxu0 0.0
    %138 = vmatprep.subr.mxu0 0.0
    %139 = vmatpush1.msra.mxu0 0.0
    %140 = vmatprep.subr.mxu0 0.0
    %141 = vmatpush1.msra.mxu0 0.0
    %142 = vmatprep.subr.mxu0 0.0
    %143 = vmatpush1.msra.mxu0 0.0
    %144 = vmatprep.subr.mxu0 0.0
    %145 = vmatpush1.msra.mxu0 %v29
    %146 = vmatprep.subr.mxu0 0.0
    %147 = vmatpush2.msra.mxu0 0.0
    %148 = vmatprep.subr.mxu0 0.0
    %149 = vmatpush2.msra.mxu0 0.0
    %150 = vmatprep.subr.mxu0 0.0
    %151 = vmatpush2.msra.mxu0 0.0
    %152 = vmatprep.subr.mxu0 0.0
    %153 = vmatpush2.msra.mxu0 0.0
    %154 = vmatprep.subr.mxu0 0.0
    %155 = vmatpush2.msra.mxu0 0.0
    %156 = vmatprep.subr.mxu0 0.0
    %157 = vmatpush2.msra.mxu0 0.0
    %158 = vmatprep.subr.mxu0 0.0
    %159 = vmatpush2.msra.mxu0 0.0
    %160 = vmatprep.subr.mxu0 0.0
    %161 = vmatpush2.msra.mxu0 0.0
    %162 = vmatprep.subr.mxu0 0.0
    %163 = vmatpush2.msra.mxu0 0.0
    %164 = vmatprep.subr.mxu0 0.0
    %165 = vmatpush2.msra.mxu0 0.0
    %166 = vmatprep.subr.mxu0 0.0
    %167 = vmatpush2.msra.mxu0 0.0
    %168 = vmatprep.subr.mxu0 0.0
    %169 = vmatpush2.msra.mxu0 0.0
    %170 = vmatprep.subr.mxu0 0.0
    %171 = vmatpush2.msra.mxu0 0.0
    %172 = vmatprep.subr.mxu0 0.0
    %173 = vmatpush2.msra.mxu0 0.0
    %174 = vmatprep.subr.mxu0 0.0
    %175 = vmatpush2.msra.mxu0 0.0
    %176 = vmatprep.subr.mxu0 0.0
    %177 = vmatpush2.msra.mxu0 0.0
    %178 = vmatprep.mubr.f32.mxu0 0.0
    %179 = vmatmul.mubr.f32.gmra.mxu0 %v112
    %v180 = vpop.f32.mrf.mxu0
    %v181 = vadd.f32 %v107, %v180
    %v182 = vpop.f32.mrf.mxu0
    %183 = vdwg.mxu0
    %v184 = vld [vmem:[#allocation2 + $0x10] sm:$0x1]
    %v185 = vlaneseq
    %v186 = vshrl.u32 %v185, 7
    %v187 = vsub.s32 0, %v186
    %v188 = vrot.slane %v184, %v187
    %v189 = vadd.f32 %v181, %v188
    %v190 = vmax.f32 %v189, 0.0
    %v191 = vld [vmem:[#allocation2 + $0x18] sm:$0xff]
    %v192 = vld [vmem:[#allocation2 + $0x20] sm:$0xff]
    %v193 = vld [vmem:[#allocation2 + $0x28] sm:$0xff]
    %v194 = vld [vmem:[#allocation2 + $0x30] sm:$0xff]
    %v195 = vld [vmem:[#allocation2 + $0x38] sm:$0xff]
    %v196 = vld [vmem:[#allocation2 + $0x40] sm:$0xff]
    %v197 = vld [vmem:[#allocation2 + $0x48] sm:$0xff]
    %v198 = vld [vmem:[#allocation2 + $0x50] sm:$0xff]
    %v199 = vld [vmem:[#allocation2 + $0x58] sm:$0xff]
    %v200 = vld [vmem:[#allocation2 + $0x60] sm:$0xff]
    %v201 = vld [vmem:[#allocation2 + $0x68] sm:$0xff]
    %v202 = vld [vmem:[#allocation2 + $0x70] sm:$0xff]
    %v203 = vld [vmem:[#allocation2 + $0x78] sm:$0xff]
    %v204 = vld [vmem:[#allocation2 + $0x80] sm:$0xff]
    %v205 = vld [vmem:[#allocation2 + $0x88] sm:$0xff]
    %v206 = vld [vmem:[#allocation2 + $0x90] sm:$0xff]
    %v207 = vld [vmem:[#allocation2 + $0x98] sm:$0x1]
    %v208 = vlaneseq
    %v209 = vshrl.u32 %v208, 7
    %v210 = vsub.s32 0, %v209
    %v211 = vrot.slane %v207, %v210
    %212 = vmatprep.subr.mxu0 0.0
    %213 = vmatpush1.msra.mxu0 %v206
    %214 = vmatprep.subr.mxu0 0.0
    %215 = vmatpush1.msra.mxu0 %v205
    %216 = vmatprep.subr.mxu0 0.0
    %217 = vmatpush1.msra.mxu0 %v204
    %218 = vmatprep.subr.mxu0 0.0
    %219 = vmatpush1.msra.mxu0 %v203
    %220 = vmatprep.subr.mxu0 0.0
    %221 = vmatpush1.msra.mxu0 %v202
    %222 = vmatprep.subr.mxu0 0.0
    %223 = vmatpush1.msra.mxu0 %v201
    %224 = vmatprep.subr.mxu0 0.0
    %225 = vmatpush1.msra.mxu0 %v200
    %226 = vmatprep.subr.mxu0 0.0
    %227 = vmatpush1.msra.mxu0 %v199
    %228 = vmatprep.subr.mxu0 0.0
    %229 = vmatpush1.msra.mxu0 %v198
    %230 = vmatprep.subr.mxu0 0.0
    %231 = vmatpush1.msra.mxu0 %v197
    %232 = vmatprep.subr.mxu0 0.0
    %233 = vmatpush1.msra.mxu0 %v196
    %234 = vmatprep.subr.mxu0 0.0
    %235 = vmatpush1.msra.mxu0 %v195
    %236 = vmatprep.subr.mxu0 0.0
    %237 = vmatpush1.msra.mxu0 %v194
    %238 = vmatprep.subr.mxu0 0.0
    %239 = vmatpush1.msra.mxu0 %v193
    %240 = vmatprep.subr.mxu0 0.0
    %241 = vmatpush1.msra.mxu0 %v192
    %242 = vmatprep.subr.mxu0 0.0
    %243 = vmatpush1.msra.mxu0 %v191
    %244 = vmatprep.subr.mxu0 0.0
    %245 = vmatpush2.msra.mxu0 0.0
    %246 = vmatprep.subr.mxu0 0.0
    %247 = vmatpush2.msra.mxu0 0.0
    %248 = vmatprep.subr.mxu0 0.0
    %249 = vmatpush2.msra.mxu0 0.0
    %250 = vmatprep.subr.mxu0 0.0
    %251 = vmatpush2.msra.mxu0 0.0
    %252 = vmatprep.subr.mxu0 0.0
    %253 = vmatpush2.msra.mxu0 0.0
    %254 = vmatprep.subr.mxu0 0.0
    %255 = vmatpush2.msra.mxu0 0.0
    %256 = vmatprep.subr.mxu0 0.0
    %257 = vmatpush2.msra.mxu0 0.0
    %258 = vmatprep.subr.mxu0 0.0
    %259 = vmatpush2.msra.mxu0 0.0
    %260 = vmatprep.subr.mxu0 0.0
    %261 = vmatpush2.msra.mxu0 0.0
    %262 = vmatprep.subr.mxu0 0.0
    %263 = vmatpush2.msra.mxu0 0.0
    %264 = vmatprep.subr.mxu0 0.0
    %265 = vmatpush2.msra.mxu0 0.0
    %266 = vmatprep.subr.mxu0 0.0
    %267 = vmatpush2.msra.mxu0 0.0
    %268 = vmatprep.subr.mxu0 0.0
    %269 = vmatpush2.msra.mxu0 0.0
    %270 = vmatprep.subr.mxu0 0.0
    %271 = vmatpush2.msra.mxu0 0.0
    %272 = vmatprep.subr.mxu0 0.0
    %273 = vmatpush2.msra.mxu0 0.0
    %274 = vmatprep.subr.mxu0 0.0
    %275 = vmatpush2.msra.mxu0 0.0
    %276 = vmatprep.mubr.f32.mxu0 0.0
    %277 = vmatmul.mubr.f32.gmra.mxu0 %v190
    %v278 = vpop.f32.mrf.mxu0
    %v279 = vadd.f32 %v211, %v278
    %v280 = vpop.f32.mrf.mxu0
    %281 = vdwg.mxu0
    %v282 = vmax.f32 %v279, 0.0
    %v283 = vld [vmem:[#allocation2 + $0xa0] sm:$0xff]
    %v284 = vld [vmem:[#allocation2 + $0xa8] sm:$0xff]
    %v285 = vld [vmem:[#allocation2 + $0xb0] sm:$0xff]
    %v286 = vld [vmem:[#allocation2 + $0xb8] sm:$0xff]
    %v287 = vld [vmem:[#allocation2 + $0xc0] sm:$0xff]
    %v288 = vld [vmem:[#allocation2 + $0xc8] sm:$0xff]
    %v289 = vld [vmem:[#allocation2 + $0xd0] sm:$0xff]
    %v290 = vld [vmem:[#allocation2 + $0xd8] sm:$0xff]
    %v291 = vld [vmem:[#allocation2 + $0xe0] sm:$0xff]
    %v292 = vld [vmem:[#allocation2 + $0xe8] sm:$0xff]
    %v293 = vld [vmem:[#allocation2 + $0xf0] sm:$0xff]
    %v294 = vld [vmem:[#allocation2 + $0xf8] sm:$0xff]
    %v295 = vld [vmem:[#allocation2 + $0x100] sm:$0xff]
    %v296 = vld [vmem:[#allocation2 + $0x108] sm:$0xff]
    %v297 = vld [vmem:[#allocation2 + $0x110] sm:$0xff]
    %v298 = vld [vmem:[#allocation2 + $0x118] sm:$0xff]
    %v299 = vld [vmem:[#allocation2 + $0x120] sm:$0x1]
    %v300 = vlaneseq
    %v301 = vshrl.u32 %v300, 7
    %v302 = vsub.s32 0, %v301
    %v303 = vrot.slane %v299, %v302
    %304 = vmatprep.subr.mxu0 0.0
    %305 = vmatpush1.msra.mxu0 %v298
    %306 = vmatprep.subr.mxu0 0.0
    %307 = vmatpush1.msra.mxu0 %v297
    %308 = vmatprep.subr.mxu0 0.0
    %309 = vmatpush1.msra.mxu0 %v296
    %310 = vmatprep.subr.mxu0 0.0
    %311 = vmatpush1.msra.mxu0 %v295
    %312 = vmatprep.subr.mxu0 0.0
    %313 = vmatpush1.msra.mxu0 %v294
    %314 = vmatprep.subr.mxu0 0.0
    %315 = vmatpush1.msra.mxu0 %v293
    %316 = vmatprep.subr.mxu0 0.0
    %317 = vmatpush1.msra.mxu0 %v292
    %318 = vmatprep.subr.mxu0 0.0
    %319 = vmatpush1.msra.mxu0 %v291
    %320 = vmatprep.subr.mxu0 0.0
    %321 = vmatpush1.msra.mxu0 %v290
    %322 = vmatprep.subr.mxu0 0.0
    %323 = vmatpush1.msra.mxu0 %v289
    %324 = vmatprep.subr.mxu0 0.0
    %325 = vmatpush1.msra.mxu0 %v288
    %326 = vmatprep.subr.mxu0 0.0
    %327 = vmatpush1.msra.mxu0 %v287
    %328 = vmatprep.subr.mxu0 0.0
    %329 = vmatpush1.msra.mxu0 %v286
    %330 = vmatprep.subr.mxu0 0.0
    %331 = vmatpush1.msra.mxu0 %v285
    %332 = vmatprep.subr.mxu0 0.0
    %333 = vmatpush1.msra.mxu0 %v284
    %334 = vmatprep.subr.mxu0 0.0
    %335 = vmatpush1.msra.mxu0 %v283
    %336 = vmatprep.subr.mxu0 0.0
    %337 = vmatpush2.msra.mxu0 0.0
    %338 = vmatprep.subr.mxu0 0.0
    %339 = vmatpush2.msra.mxu0 0.0
    %340 = vmatprep.subr.mxu0 0.0
    %341 = vmatpush2.msra.mxu0 0.0
    %342 = vmatprep.subr.mxu0 0.0
    %343 = vmatpush2.msra.mxu0 0.0
    %344 = vmatprep.subr.mxu0 0.0
    %345 = vmatpush2.msra.mxu0 0.0
    %346 = vmatprep.subr.mxu0 0.0
    %347 = vmatpush2.msra.mxu0 0.0
    %348 = vmatprep.subr.mxu0 0.0
    %349 = vmatpush2.msra.mxu0 0.0
    %350 = vmatprep.subr.mxu0 0.0
    %351 = vmatpush2.msra.mxu0 0.0
    %352 = vmatprep.subr.mxu0 0.0
    %353 = vmatpush2.msra.mxu0 0.0
    %354 = vmatprep.subr.mxu0 0.0
    %355 = vmatpush2.msra.mxu0 0.0
    %356 = vmatprep.subr.mxu0 0.0
    %357 = vmatpush2.msra.mxu0 0.0
    %358 = vmatprep.subr.mxu0 0.0
    %359 = vmatpush2.msra.mxu0 0.0
    %360 = vmatprep.subr.mxu0 0.0
    %361 = vmatpush2.msra.mxu0 0.0
    %362 = vmatprep.subr.mxu0 0.0
    %363 = vmatpush2.msra.mxu0 0.0
    %364 = vmatprep.subr.mxu0 0.0
    %365 = vmatpush2.msra.mxu0 0.0
    %366 = vmatprep.subr.mxu0 0.0
    %367 = vmatpush2.msra.mxu0 0.0
    %368 = vmatprep.mubr.f32.mxu0 0.0
    %369 = vmatmul.mubr.f32.gmra.mxu0 %v282
    %v370 = vpop.f32.mrf.mxu0
    %v371 = vadd.f32 %v303, %v370
    %v372 = vpop.f32.mrf.mxu0
    %373 = vdwg.mxu0
    %374 = vst [vmem:[%s3] sm:$0xff] %v371
    // Predicated region
    $region18: #{critic_forward.1} parent=1 // pred_check
      _
    $region19: #{critic_forward.1} parent=1 // pred_check_branch
      %376 = sbr.rel (0) target = $region21
    $region20: #{critic_forward.1} parent=1 // pred_region
      _
    $region21: #{critic_forward.1} parent=1 // pred_fallthru
      _
    // Predicated region
    $region22: #{critic_forward.1} parent=1 // pred_check
      _
    $region23: #{critic_forward.1} parent=1 // pred_check_branch
      %378 = sbr.rel (0) target = $region25
    $region24: #{critic_forward.1} parent=1 // pred_region
      _
    $region25: #{critic_forward.1} parent=1 // pred_fallthru
      _
    %379 = vsyncpa [#allocation3], 1

</llo_original>
